<compile_context>
chip_gen: v5e
topology: v5e:2x2
jax: 0.10.0
libtpu: 0.0.40
codegen_flags: <defaults>
</compile_context>

<pallas_src>
import functools

import jax
import jax.numpy as jnp
from jax.experimental import pallas as pl
from jax.experimental.pallas import tpu as pltpu


def split_kernel(rgb_ref, depth_ref, w1x_ref, w1y_ref, b1_ref, w2_ref, b2_ref,
                 out_ref, *, lambda_x, lambda_y, h, w, use_mxu):
    # merged input for this batch block: (Bb, C, H*W), lane-dense last axis.
    m = rgb_ref[...] + depth_ref[...]

    # ---- pooling -----------------------------------------------------------
    # avg component is shared by both directions:
    #   mean(left)+mean(right) == mean(top)+mean(bot) == 2 * mean(m)
    # folded to sum * (2/(h*w)); sum accumulates in f32 (bf16-safe).
    avg2 = jnp.sum(m, axis=-1, dtype=jnp.float32) * (2.0 / (h * w))   # (Bb, C)

    # Masks from a tiny (1, 1, HW) iota, broadcast by jnp.where (no
    # full-block int32 temp).  Max reductions run in the input dtype
    # (exact for bf16) and only the (Bb, C) results are upcast.
    idx = jax.lax.broadcasted_iota(jnp.int32, (1, 1, h * w), 2)
    if (w & (w - 1)) == 0:
        col = idx & (w - 1)
    else:
        col = idx % w
    left_mask = col < (w // 2)             # x-direction halves
    top_mask = idx < (h // 2) * w          # y-direction halves (row-major)

    neg_inf = jnp.array(-jnp.inf, dtype=m.dtype)
    max_left = jnp.max(jnp.where(left_mask, m, neg_inf), axis=-1).astype(jnp.float32)
    max_right = jnp.max(jnp.where(left_mask, neg_inf, m), axis=-1).astype(jnp.float32)
    max_top = jnp.max(jnp.where(top_mask, m, neg_inf), axis=-1).astype(jnp.float32)
    max_bot = jnp.max(jnp.where(top_mask, neg_inf, m), axis=-1).astype(jnp.float32)

    x_comb = avg2 + max_left + max_right                    # (Bb, C) f32
    y_comb = avg2 + max_top + max_bot                       # (Bb, C) f32

    # ---- tiny channel-weight MLP ((B,2C)->(C//r)->2) ------------------------
    # Linear(2C -> hidden): pooled @ W1^T == x_comb @ W1x^T + y_comb @ W1y^T
    w1x = w1x_ref[...]                                      # (hidden, C) f32
    w1y = w1y_ref[...]                                      # (hidden, C) f32
    if use_mxu:
        # Large C: contract on the MXU, frees VALU/XLU slots used by pooling.
        dn = (((1,), (1,)), ((), ()))
        hpre = (jax.lax.dot_general(x_comb, w1x, dn,
                                    preferred_element_type=jnp.float32)
                + jax.lax.dot_general(y_comb, w1y, dn,
                                      preferred_element_type=jnp.float32)
                + b1_ref[...])                               # (Bb, hidden)
    else:
        # Small C: broadcast-multiply + lane reductions on VPU/XLU.
        hpre = (jnp.sum(x_comb[:, None, :] * w1x[None, :, :], axis=-1)
                + jnp.sum(y_comb[:, None, :] * w1y[None, :, :], axis=-1)
                + b1_ref[...])                               # (Bb, hidden)
    hact = jnp.maximum(hpre, 0.0)
    # Linear(hidden -> 2) + sigmoid
    logits = (jnp.sum(hact[:, None, :] * w2_ref[...][None, :, :], axis=-1)
              + b2_ref[...])                                 # (Bb, 2)
    cw = jax.nn.sigmoid(logits)

    # fused_x = m*cw0, fused_y = m*cw1  =>  single per-batch scale, applied in
    # the input dtype (no full-block f32 copy for bf16 inputs).
    scale = lambda_x * cw[:, 0:1] + lambda_y * cw[:, 1:2]    # (Bb, 1) f32
    out_ref[...] = (m * scale.astype(m.dtype)[:, :, None]).astype(out_ref.dtype)


def split_forward(rgb, depth, w1, b1, w2, b2, lambda_x=0.5, lambda_y=0.5):
    B, C, H, W = rgb.shape
    assert H % 2 == 0 and W % 2 == 0, "Split expects even spatial dims"
    HW = H * W
    hidden = w1.shape[0]

    # Lane-dense views of the activations (host-side reshape is free).
    # TODO(synk): when HW % 128 != 0 this still runs correctly but the output
    # store becomes a masked partial store; a padded-lane variant would be
    # needed to recover full-width vst on such shapes.
    rgb3 = rgb.reshape(B, C, HW)
    depth3 = depth.reshape(B, C, HW)

    # MLP parameters (PyTorch Linear layout), upcast to f32.
    w1f = w1.astype(jnp.float32)
    w1x = w1f[:, :C]                          # (hidden, C)
    w1y = w1f[:, C:]                          # (hidden, C)
    b1r = b1.astype(jnp.float32).reshape(1, hidden)
    w2f = w2.astype(jnp.float32)              # (2, hidden)
    b2r = b2.astype(jnp.float32).reshape(1, 2)

    # ---- generation-aware block sizing --------------------------------------
    try:
        vmem_cap = int(pltpu.get_tpu_info().vmem_capacity_bytes)
    except Exception:  # conservative default if hw query is unavailable
        vmem_cap = 128 << 20
    # ~4 MiB blocks on v5e/v6e (128 MiB VMEM), ~2 MiB on v7x (64 MiB per TC).
    target_block_bytes = (2 << 20) if vmem_cap <= (64 << 20) else (4 << 20)

    per_elem_bytes = C * HW * jnp.dtype(rgb.dtype).itemsize
    bb = max(1, min(target_block_bytes // per_elem_bytes, B))
    if B >= 2:
        # keep >= 2 grid steps so both v7x TensorCores get work
        bb = min(bb, pl.cdiv(B, 2))
    bb = int(bb)
    grid = (pl.cdiv(B, bb),)   # ceil-div grid: ragged last block, any B works
    # TODO(synk): for B == 1 the grid has a single step, leaving one v7x
    # TensorCore idle; splitting that case needs a two-phase (pool+MLP, then
    # 2-D-grid scale) kernel.

    block_bytes = bb * per_elem_bytes
    # Budget: 2 inputs + 1 output double-buffered (6x block) plus ~4x block of
    # f32-wide in-kernel temps, plus params/slack.
    vmem_needed = 6 * block_bytes + 4 * bb * C * HW * 4 + (2 << 20)
    vmem_limit = int(min(int(0.75 * vmem_cap), max(vmem_needed, 32 << 20)))

    use_mxu = C >= 128

    kernel = functools.partial(split_kernel, lambda_x=float(lambda_x),
                               lambda_y=float(lambda_y), h=H, w=W,
                               use_mxu=use_mxu)
    out3 = pl.pallas_call(
        kernel,
        out_shape=jax.ShapeDtypeStruct((B, C, HW), rgb.dtype),
        grid=grid,
        in_specs=[
            pl.BlockSpec((bb, C, HW), lambda i: (i, 0, 0)),     # rgb
            pl.BlockSpec((bb, C, HW), lambda i: (i, 0, 0)),     # depth
            pl.BlockSpec((hidden, C), lambda i: (0, 0)),        # W1 (x half)
            pl.BlockSpec((hidden, C), lambda i: (0, 0)),        # W1 (y half)
            pl.BlockSpec((1, hidden), lambda i: (0, 0)),        # b1
            pl.BlockSpec((2, hidden), lambda i: (0, 0)),        # W2
            pl.BlockSpec((1, 2), lambda i: (0, 0)),             # b2
        ],
        out_specs=pl.BlockSpec((bb, C, HW), lambda i: (i, 0, 0)),
        compiler_params=pltpu.CompilerParams(
            dimension_semantics=("parallel",),
            vmem_limit_bytes=vmem_limit),
    )(rgb3, depth3, w1x, w1y, b1r, w2f, b2r)
    return out3.reshape(B, C, H, W)


def reference_forward(rgb, depth, w1, b1, w2, b2, lambda_x=0.5, lambda_y=0.5):
    m = rgb + depth
    B, C, H, W = m.shape

    def pool(x):
        return jnp.mean(x, axis=(2, 3)) + jnp.max(x, axis=(2, 3))

    x_comb = pool(m[:, :, :, :W // 2]) + pool(m[:, :, :, W // 2:])
    y_comb = pool(m[:, :, :H // 2, :]) + pool(m[:, :, H // 2:, :])
    pooled = jnp.concatenate([x_comb, y_comb], axis=1)          # (B, 2C)
    h1 = jax.nn.relu(pooled @ w1.T + b1)
    cw = jax.nn.sigmoid(h1 @ w2.T + b2)                          # (B, 2)
    fused_x = m * cw[:, 0][:, None, None, None]
    fused_y = m * cw[:, 1][:, None, None, None]
    return lambda_x * fused_x + lambda_y * fused_y


if __name__ == "__main__":
    B, C, H, W = 2, 16, 16, 16
    reduction = 4
    hidden = C // reduction
    lambda_x, lambda_y = 0.5, 0.5

    key = jax.random.PRNGKey(0)
    k_rgb, k_depth, k_w1, k_b1, k_w2, k_b2 = jax.random.split(key, 6)

    rgb = jax.random.normal(k_rgb, (B, C, H, W), dtype=jnp.float32)
    depth = jax.random.normal(k_depth, (B, C, H, W), dtype=jnp.float32)

    # Deterministic synthetic MLP parameters (PyTorch Linear weight shapes).
    w1 = 0.1 * jax.random.normal(k_w1, (hidden, 2 * C), dtype=jnp.float32)  # (C//r, 2C)
    b1 = 0.1 * jax.random.normal(k_b1, (hidden,), dtype=jnp.float32)
    w2 = 0.1 * jax.random.normal(k_w2, (2, hidden), dtype=jnp.float32)      # (2, C//r)
    b2 = 0.1 * jax.random.normal(k_b2, (2,), dtype=jnp.float32)

    out = split_forward(rgb, depth, w1, b1, w2, b2, lambda_x, lambda_y)
    out = jax.block_until_ready(out)

    ref = reference_forward(rgb, depth, w1, b1, w2, b2, lambda_x, lambda_y)
    assert out.shape == (B, C, H, W)
    assert jnp.allclose(out, ref, rtol=1e-5, atol=1e-5), "mismatch vs reference"

    print("KERNEL_OK")
</pallas_src>

<mosaic_0001>
module attributes {stable_mosaic.version = 11 : i64} {
  func.func @split_kernel(%arg0: i32, %arg1: memref<1x16x256xf32, #tpu.memory_space<vmem>>, %arg2: memref<1x16x256xf32, #tpu.memory_space<vmem>>, %arg3: memref<4x16xf32, #tpu.memory_space<vmem>>, %arg4: memref<4x16xf32, #tpu.memory_space<vmem>>, %arg5: memref<1x4xf32, #tpu.memory_space<vmem>>, %arg6: memref<2x4xf32, #tpu.memory_space<vmem>>, %arg7: memref<1x2xf32, #tpu.memory_space<vmem>>, %arg8: memref<1x16x256xf32, #tpu.memory_space<vmem>>) attributes {dimension_semantics = [#tpu.dimension_semantics<parallel>], iteration_bounds = array<i64: 2>, scalar_prefetch = 0 : i64, scratch_operands = 0 : i64, tpu.core_type = #tpu.core_type<tc>, window_params = [{transform_indices = @transform_0, window_bounds = array<i64: 1, 16, 256>}, {transform_indices = @transform_1, window_bounds = array<i64: 1, 16, 256>}, {pipeline_mode = #tpu.pipeline_mode<synchronous>, transform_indices = @transform_2, window_bounds = array<i64: 4, 16>}, {pipeline_mode = #tpu.pipeline_mode<synchronous>, transform_indices = @transform_3, window_bounds = array<i64: 4, 16>}, {pipeline_mode = #tpu.pipeline_mode<synchronous>, transform_indices = @transform_4, window_bounds = array<i64: 1, 4>}, {pipeline_mode = #tpu.pipeline_mode<synchronous>, transform_indices = @transform_5, window_bounds = array<i64: 2, 4>}, {pipeline_mode = #tpu.pipeline_mode<synchronous>, transform_indices = @transform_6, window_bounds = array<i64: 1, 2>}, {transform_indices = @transform_7, window_bounds = array<i64: 1, 16, 256>}]} {
    %c0 = arith.constant 0 : index
    %c0_0 = arith.constant 0 : index
    %c0_1 = arith.constant 0 : index
    %0 = vector.load %arg1[%c0, %c0_0, %c0_1] : memref<1x16x256xf32, #tpu.memory_space<vmem>>, vector<1x16x256xf32>
    %c0_2 = arith.constant 0 : index
    %c0_3 = arith.constant 0 : index
    %c0_4 = arith.constant 0 : index
    %1 = vector.load %arg2[%c0_2, %c0_3, %c0_4] : memref<1x16x256xf32, #tpu.memory_space<vmem>>, vector<1x16x256xf32>
    %2 = arith.addf %0, %1 : vector<1x16x256xf32>
    %cst = arith.constant dense<0.000000e+00> : vector<1x16xf32>
    %3 = vector.multi_reduction <add>, %2, %cst [2] : vector<1x16x256xf32> to vector<1x16xf32>
    %cst_5 = arith.constant 7.812500e-03 : f32
    %4 = vector.broadcast %cst_5 : f32 to vector<1x16xf32>
    %5 = arith.mulf %3, %4 : vector<1x16xf32>
    %6 = tpu.iota {dimensions = array<i32: 2>} : vector<1x1x256xi32>
    %c15_i32 = arith.constant 15 : i32
    %7 = vector.broadcast %c15_i32 : i32 to vector<1x1x256xi32>
    %8 = arith.andi %6, %7 : vector<1x1x256xi32>
    %c8_i32 = arith.constant 8 : i32
    %9 = vector.broadcast %c8_i32 : i32 to vector<1x1x256xi32>
    %10 = arith.cmpi slt, %8, %9 : vector<1x1x256xi32>
    %c128_i32 = arith.constant 128 : i32
    %11 = vector.broadcast %c128_i32 : i32 to vector<1x1x256xi32>
    %12 = arith.cmpi slt, %6, %11 : vector<1x1x256xi32>
    %cst_6 = arith.constant 0xFF800000 : f32
    %13 = vector.shape_cast %10 : vector<1x1x256xi1> to vector<1x1x256xi1>
    %14 = vector.broadcast %13 : vector<1x1x256xi1> to vector<1x16x256xi1>
    %15 = vector.broadcast %cst_6 : f32 to vector<1x16x256xf32>
    %16 = arith.select %14, %2, %15 : vector<1x16x256xi1>, vector<1x16x256xf32>
    %cst_7 = arith.constant dense<0xFF800000> : vector<1x16xf32>
    %17 = vector.multi_reduction <maximumf>, %16, %cst_7 [2] : vector<1x16x256xf32> to vector<1x16xf32>
    %cst_8 = arith.constant 0xFF800000 : f32
    %18 = vector.shape_cast %10 : vector<1x1x256xi1> to vector<1x1x256xi1>
    %19 = vector.broadcast %18 : vector<1x1x256xi1> to vector<1x16x256xi1>
    %20 = vector.broadcast %cst_8 : f32 to vector<1x16x256xf32>
    %21 = arith.select %19, %20, %2 : vector<1x16x256xi1>, vector<1x16x256xf32>
    %cst_9 = arith.constant dense<0xFF800000> : vector<1x16xf32>
    %22 = vector.multi_reduction <maximumf>, %21, %cst_9 [2] : vector<1x16x256xf32> to vector<1x16xf32>
    %cst_10 = arith.constant 0xFF800000 : f32
    %23 = vector.shape_cast %12 : vector<1x1x256xi1> to vector<1x1x256xi1>
    %24 = vector.broadcast %23 : vector<1x1x256xi1> to vector<1x16x256xi1>
    %25 = vector.broadcast %cst_10 : f32 to vector<1x16x256xf32>
    %26 = arith.select %24, %2, %25 : vector<1x16x256xi1>, vector<1x16x256xf32>
    %cst_11 = arith.constant dense<0xFF800000> : vector<1x16xf32>
    %27 = vector.multi_reduction <maximumf>, %26, %cst_11 [2] : vector<1x16x256xf32> to vector<1x16xf32>
    %cst_12 = arith.constant 0xFF800000 : f32
    %28 = vector.shape_cast %12 : vector<1x1x256xi1> to vector<1x1x256xi1>
    %29 = vector.broadcast %28 : vector<1x1x256xi1> to vector<1x16x256xi1>
    %30 = vector.broadcast %cst_12 : f32 to vector<1x16x256xf32>
    %31 = arith.select %29, %30, %2 : vector<1x16x256xi1>, vector<1x16x256xf32>
    %cst_13 = arith.constant dense<0xFF800000> : vector<1x16xf32>
    %32 = vector.multi_reduction <maximumf>, %31, %cst_13 [2] : vector<1x16x256xf32> to vector<1x16xf32>
    %33 = arith.addf %5, %17 : vector<1x16xf32>
    %34 = arith.addf %33, %22 : vector<1x16xf32>
    %35 = arith.addf %5, %27 : vector<1x16xf32>
    %36 = arith.addf %35, %32 : vector<1x16xf32>
    %c0_14 = arith.constant 0 : index
    %c0_15 = arith.constant 0 : index
    %37 = vector.load %arg3[%c0_14, %c0_15] : memref<4x16xf32, #tpu.memory_space<vmem>>, vector<4x16xf32>
    %c0_16 = arith.constant 0 : index
    %c0_17 = arith.constant 0 : index
    %38 = vector.load %arg4[%c0_16, %c0_17] : memref<4x16xf32, #tpu.memory_space<vmem>>, vector<4x16xf32>
    %39 = vector.shape_cast %34 : vector<1x16xf32> to vector<1x1x16xf32>
    %40 = vector.shape_cast %37 : vector<4x16xf32> to vector<1x4x16xf32>
    %41 = vector.broadcast %39 : vector<1x1x16xf32> to vector<1x4x16xf32>
    %42 = arith.mulf %41, %40 : vector<1x4x16xf32>
    %cst_18 = arith.constant dense<0.000000e+00> : vector<1x4xf32>
    %43 = vector.multi_reduction <add>, %42, %cst_18 [2] : vector<1x4x16xf32> to vector<1x4xf32>
    %44 = vector.shape_cast %36 : vector<1x16xf32> to vector<1x1x16xf32>
    %45 = vector.shape_cast %38 : vector<4x16xf32> to vector<1x4x16xf32>
    %46 = vector.broadcast %44 : vector<1x1x16xf32> to vector<1x4x16xf32>
    %47 = arith.mulf %46, %45 : vector<1x4x16xf32>
    %cst_19 = arith.constant dense<0.000000e+00> : vector<1x4xf32>
    %48 = vector.multi_reduction <add>, %47, %cst_19 [2] : vector<1x4x16xf32> to vector<1x4xf32>
    %49 = arith.addf %43, %48 : vector<1x4xf32>
    %c0_20 = arith.constant 0 : index
    %c0_21 = arith.constant 0 : index
    %50 = vector.load %arg5[%c0_20, %c0_21] : memref<1x4xf32, #tpu.memory_space<vmem>>, vector<1x4xf32>
    %51 = arith.addf %49, %50 : vector<1x4xf32>
    %cst_22 = arith.constant 0.000000e+00 : f32
    %52 = vector.broadcast %cst_22 : f32 to vector<1x4xf32>
    %53 = arith.maximumf %51, %52 : vector<1x4xf32>
    %54 = vector.shape_cast %53 : vector<1x4xf32> to vector<1x1x4xf32>
    %c0_23 = arith.constant 0 : index
    %c0_24 = arith.constant 0 : index
    %55 = vector.load %arg6[%c0_23, %c0_24] : memref<2x4xf32, #tpu.memory_space<vmem>>, vector<2x4xf32>
    %56 = vector.shape_cast %55 : vector<2x4xf32> to vector<1x2x4xf32>
    %57 = vector.broadcast %54 : vector<1x1x4xf32> to vector<1x2x4xf32>
    %58 = arith.mulf %57, %56 : vector<1x2x4xf32>
    %cst_25 = arith.constant dense<0.000000e+00> : vector<1x2xf32>
    %59 = vector.multi_reduction <add>, %58, %cst_25 [2] : vector<1x2x4xf32> to vector<1x2xf32>
    %c0_26 = arith.constant 0 : index
    %c0_27 = arith.constant 0 : index
    %60 = vector.load %arg7[%c0_26, %c0_27] : memref<1x2xf32, #tpu.memory_space<vmem>>, vector<1x2xf32>
    %61 = arith.addf %59, %60 : vector<1x2xf32>
    %62 = arith.negf %61 : vector<1x2xf32>
    %63 = math.exp %62 : vector<1x2xf32>
    %cst_28 = arith.constant 1.000000e+00 : f32
    %64 = vector.broadcast %cst_28 : f32 to vector<1x2xf32>
    %65 = arith.addf %64, %63 : vector<1x2xf32>
    %66 = arith.divf %64, %65 : vector<1x2xf32>
    %67 = vector.extract_strided_slice %66 {offsets = [0, 0], sizes = [1, 1], strides = [1, 1]} : vector<1x2xf32> to vector<1x1xf32>
    %cst_29 = arith.constant 5.000000e-01 : f32
    %68 = vector.broadcast %cst_29 : f32 to vector<1x1xf32>
    %69 = arith.mulf %68, %67 : vector<1x1xf32>
    %70 = vector.extract_strided_slice %66 {offsets = [0, 1], sizes = [1, 1], strides = [1, 1]} : vector<1x2xf32> to vector<1x1xf32>
    %cst_30 = arith.constant 5.000000e-01 : f32
    %71 = vector.broadcast %cst_30 : f32 to vector<1x1xf32>
    %72 = arith.mulf %71, %70 : vector<1x1xf32>
    %73 = arith.addf %69, %72 : vector<1x1xf32>
    %74 = vector.shape_cast %73 : vector<1x1xf32> to vector<1x1x1xf32>
    %75 = vector.broadcast %74 : vector<1x1x1xf32> to vector<1x16x256xf32>
    %76 = arith.mulf %2, %75 : vector<1x16x256xf32>
    %c0_31 = arith.constant 0 : index
    %c0_32 = arith.constant 0 : index
    %c0_33 = arith.constant 0 : index
    %77 = vector.load %arg8[%c0_31, %c0_32, %c0_33] : memref<1x16x256xf32, #tpu.memory_space<vmem>>, vector<1x16x256xf32>
    tpu.vector_store %arg8[%c0_31, %c0_32, %c0_33], %76 {strides = array<i32>} : memref<1x16x256xf32, #tpu.memory_space<vmem>>, vector<1x16x256xf32>,
    return
  }
  func.func @transform_0(%arg0: i32) -> (i32, i32, i32) {
    %c0_i32 = arith.constant 0 : i32
    %c0_i32_0 = arith.constant 0 : i32
    %c0_i32_1 = arith.constant 0 : i32
    return %arg0, %c0_i32, %c0_i32_0 : i32, i32, i32
  }
  func.func @transform_1(%arg0: i32) -> (i32, i32, i32) {
    %c0_i32 = arith.constant 0 : i32
    %c0_i32_0 = arith.constant 0 : i32
    %c0_i32_1 = arith.constant 0 : i32
    return %arg0, %c0_i32, %c0_i32_0 : i32, i32, i32
  }
  func.func @transform_2(%arg0: i32) -> (i32, i32) {
    %c0_i32 = arith.constant 0 : i32
    %c0_i32_0 = arith.constant 0 : i32
    %c0_i32_1 = arith.constant 0 : i32
    return %c0_i32, %c0_i32_0 : i32, i32
  }
  func.func @transform_3(%arg0: i32) -> (i32, i32) {
    %c0_i32 = arith.constant 0 : i32
    %c0_i32_0 = arith.constant 0 : i32
    %c0_i32_1 = arith.constant 0 : i32
    return %c0_i32, %c0_i32_0 : i32, i32
  }
  func.func @transform_4(%arg0: i32) -> (i32, i32) {
    %c0_i32 = arith.constant 0 : i32
    %c0_i32_0 = arith.constant 0 : i32
    %c0_i32_1 = arith.constant 0 : i32
    return %c0_i32, %c0_i32_0 : i32, i32
  }
  func.func @transform_5(%arg0: i32) -> (i32, i32) {
    %c0_i32 = arith.constant 0 : i32
    %c0_i32_0 = arith.constant 0 : i32
    %c0_i32_1 = arith.constant 0 : i32
    return %c0_i32, %c0_i32_0 : i32, i32
  }
  func.func @transform_6(%arg0: i32) -> (i32, i32) {
    %c0_i32 = arith.constant 0 : i32
    %c0_i32_0 = arith.constant 0 : i32
    %c0_i32_1 = arith.constant 0 : i32
    return %c0_i32, %c0_i32_0 : i32, i32
  }
  func.func @transform_7(%arg0: i32) -> (i32, i32, i32) {
    %c0_i32 = arith.constant 0 : i32
    %c0_i32_0 = arith.constant 0 : i32
    %c0_i32_1 = arith.constant 0 : i32
    return %arg0, %c0_i32, %c0_i32_0 : i32, i32, i32
  }
}

</mosaic_0001>

<llo_original>
// kernel: tpu_custom_call.1
$region0: #{tpu_custom_call.1}
  #allocation0 [shape = 'u32[]', space=smem, size = 0x4, offset = 0x4, fixed_abs, tag = 'smem constant byte address 0x4 - core index']
  #allocation1 [shape = 'u32[72,128]{1,0:T(1,128)}', space=vmem, size = 0x9000, scoped, tag = 'internal scratch']
  %s0 = inlined_call_operand.hbm [shape: f32[2,16,256], index: 0, kind: input, shape index: {}]
  %s1 = inlined_call_operand.hbm [shape: f32[2,16,256], index: 1, kind: input, shape index: {}]
  %s2 = inlined_call_operand.hbm [shape: f32[4,16], index: 2, kind: input, shape index: {}]
  %s3 = inlined_call_operand.hbm [shape: f32[4,16], index: 3, kind: input, shape index: {}]
  %s4 = inlined_call_operand.vmem [shape: f32[1,4], index: 4, kind: input, shape index: {}]
  %s5 = inlined_call_operand.vmem [shape: f32[2,4], index: 5, kind: input, shape index: {}]
  %s6 = inlined_call_operand.vmem [shape: f32[1,2], index: 6, kind: input, shape index: {}]
  %s7 = inlined_call_operand.hbm [shape: f32[2,16,256], index: 7, kind: output, shape index: {}]
  %s8 = sld [smem:[#allocation0]]
  $region77: #{tpu_custom_call.1} parent=0
    _
  %s10 = ssub.s32 1, %s8
  %s11 = scalar_select 0, %s10, %s8
  $region1: #{tpu_custom_call.1} parent=0
    #allocation2 [shape = 'u8[32768]{0}', space=vmem, size = 0x8000, scoped, tag = 'input window, operand 0']
    #allocation3 [shape = 's32[2]{0}', space=sflag, size = 0x8, scoped, tag = 'scoped memory for tpu_custom_call.1']
    #allocation4 [shape = 's32[2]{0}', space=sflag, size = 0x8, scoped, tag = 'scoped memory for tpu_custom_call.1']
    #allocation5 [shape = 'u8[32768]{0}', space=vmem, size = 0x8000, scoped, tag = 'input window, operand 1']
    #allocation6 [shape = 's32[2]{0}', space=sflag, size = 0x8, scoped, tag = 'scoped memory for tpu_custom_call.1']
    #allocation7 [shape = 'u8[2048]{0}', space=vmem, size = 0x800, scoped, tag = 'input window, operand 2, single buffered']
    #allocation8 [shape = 'u8[2048]{0}', space=vmem, size = 0x800, scoped, tag = 'input window, operand 3, single buffered']
    #allocation9 [shape = 's32[1]{0}', space=sflag, size = 0x4, scoped, tag = 'scoped memory for tpu_custom_call.1']
    #allocation10 [shape = 'u8[32768]{0}', space=vmem, size = 0x8000, scoped, tag = 'output window, operand 0']
    %12 = vsyncpa [#allocation3], 0
    %s13 = scalar_lea.sflag [#allocation3], 1
    %14 = vsyncpa %s13, 0
    %15 = vsyncpa [#allocation6], 0
    %s16 = scalar_lea.sflag [#allocation6], 1
    %17 = vsyncpa %s16, 0
    %18 = vsyncpa [#allocation9], 0
    %19 = vsyncpa [#allocation4], 0
    %s20 = scalar_lea.sflag [#allocation4], 1
    %21 = vsyncpa %s20, 0
    loop: start=0, step=1, limit=4
    $region2: #{tpu_custom_call.1} parent=1 // loop_pre_header
      _
    $region3: #{tpu_custom_call.1} parent=1 // loop_header
      %s23 = sphi 0, %s27
      %p24 = scmp.ge.s32.totalorder %s23, 4
      %s33 = sphi 0, %s35
      %s36 = sphi 0, %s33
      %s37 = sphi 0, %s36
      %s53 = sphi 0, %s37
      %s59 = sphi 0, %s61
      %s62 = sphi 0, %s59
      %s63 = sphi 0, %s62
      %s79 = sphi 0, %s63
      %s83 = sphi 0, %s83
      %s85 = sphi 0, %s83
      %s86 = sphi 0, %s85
      %s100 = sphi 0, %s86
      %s104 = sphi 0, %s104
      %s106 = sphi 0, %s104
      %s107 = sphi 0, %s106
      %s121 = sphi 0, %s107
      %s125 = sphi 0, %s125
      %s127 = sphi 0, %s125
      %s128 = sphi 0, %s127
      %s142 = sphi 0, %s128
      %s146 = sphi 0, %s146
      %s148 = sphi 0, %s146
      %s149 = sphi 0, %s148
      %s163 = sphi 0, %s149
      %s167 = sphi 0, %s167
      %s169 = sphi 0, %s167
      %s170 = sphi 0, %s169
      %s184 = sphi 0, %s170
      %s190 = sphi 0, %s192
      %s193 = sphi 0, %s190
      %s194 = sphi 0, %s193
      %s210 = sphi 0, %s194
    $region4: #{tpu_custom_call.1} parent=1 // loop_header_branch
      %26 = sbr.rel (%p24) target = $region8
    $region5: #{tpu_custom_call.1} parent=1 // loop_body
      %s28 = ssub.s32 %s23, 1
      %s29 = ssub.s32 %s23, 2
      %s30 = sadd.s32 %s23, 1
      %s31 = ssub.s32 %s23, %s30
      %p32 = scmp.eq.s32.totalorder %s31, 0
      %s34 = sadd.s32 %s33, 1
      %s35 = scalar_select %p32, %s33, %s34
      %p38 = pneg %p32
      %p39 = scmp.eq.s32.totalorder %s23, 1
      %p40 = por %p38, %p39
      %p41 = scmp.ne.s32.totalorder %s33, %s36
      %p42 = scmp.eq.s32.totalorder %s23, 0
      %p43 = por %p41, %p42
      %p44 = scmp.ne.s32.totalorder %s33, %s36
      %p45 = scmp.eq.s32.totalorder %s28, 1
      %p46 = por %p44, %p45
      %p47 = scmp.ne.s32.totalorder %s36, %s37
      %p48 = scmp.eq.s32.totalorder %s28, 0
      %p49 = por %p47, %p48
      %p50 = scmp.ne.s32.totalorder %s36, %s37
      %p51 = scmp.eq.s32.totalorder %s29, 1
      %p52 = por %p50, %p51
      %p54 = scmp.ne.s32.totalorder %s37, %s53
      %p55 = scmp.eq.s32.totalorder %s29, 0
      %p56 = por %p54, %p55
      %s57 = ssub.s32 %s23, %s30
      %p58 = scmp.eq.s32.totalorder %s57, 0
      %s60 = sadd.s32 %s59, 1
      %s61 = scalar_select %p58, %s59, %s60
      %p64 = pneg %p58
      %p65 = scmp.eq.s32.totalorder %s23, 1
      %p66 = por %p64, %p65
      %p67 = scmp.ne.s32.totalorder %s59, %s62
      %p68 = scmp.eq.s32.totalorder %s23, 0
      %p69 = por %p67, %p68
      %p70 = scmp.ne.s32.totalorder %s59, %s62
      %p71 = scmp.eq.s32.totalorder %s28, 1
      %p72 = por %p70, %p71
      %p73 = scmp.ne.s32.totalorder %s62, %s63
      %p74 = scmp.eq.s32.totalorder %s28, 0
      %p75 = por %p73, %p74
      %p76 = scmp.ne.s32.totalorder %s62, %s63
      %p77 = scmp.eq.s32.totalorder %s29, 1
      %p78 = por %p76, %p77
      %p80 = scmp.ne.s32.totalorder %s63, %s79
      %p81 = scmp.eq.s32.totalorder %s29, 0
      %p82 = por %p80, %p81
      %s84 = sadd.s32 %s83, 1
      %p87 = scmp.eq.s32.totalorder %s23, 1
      %p88 = scmp.ne.s32.totalorder %s83, %s85
      %p89 = scmp.eq.s32.totalorder %s23, 0
      %p90 = por %p88, %p89
      %p91 = scmp.ne.s32.totalorder %s83, %s85
      %p92 = scmp.eq.s32.totalorder %s28, 1
      %p93 = por %p91, %p92
      %p94 = scmp.ne.s32.totalorder %s85, %s86
      %p95 = scmp.eq.s32.totalorder %s28, 0
      %p96 = por %p94, %p95
      %p97 = scmp.ne.s32.totalorder %s85, %s86
      %p98 = scmp.eq.s32.totalorder %s29, 1
      %p99 = por %p97, %p98
      %p101 = scmp.ne.s32.totalorder %s86, %s100
      %p102 = scmp.eq.s32.totalorder %s29, 0
      %p103 = por %p101, %p102
      %s105 = sadd.s32 %s104, 1
      %p108 = scmp.eq.s32.totalorder %s23, 1
      %p109 = scmp.ne.s32.totalorder %s104, %s106
      %p110 = scmp.eq.s32.totalorder %s23, 0
      %p111 = por %p109, %p110
      %p112 = scmp.ne.s32.totalorder %s104, %s106
      %p113 = scmp.eq.s32.totalorder %s28, 1
      %p114 = por %p112, %p113
      %p115 = scmp.ne.s32.totalorder %s106, %s107
      %p116 = scmp.eq.s32.totalorder %s28, 0
      %p117 = por %p115, %p116
      %p118 = scmp.ne.s32.totalorder %s106, %s107
      %p119 = scmp.eq.s32.totalorder %s29, 1
      %p120 = por %p118, %p119
      %p122 = scmp.ne.s32.totalorder %s107, %s121
      %p123 = scmp.eq.s32.totalorder %s29, 0
      %p124 = por %p122, %p123
      %s126 = sadd.s32 %s125, 1
      %p129 = scmp.eq.s32.totalorder %s23, 1
      %p130 = scmp.ne.s32.totalorder %s125, %s127
      %p131 = scmp.eq.s32.totalorder %s23, 0
      %p132 = por %p130, %p131
      %p133 = scmp.ne.s32.totalorder %s125, %s127
      %p134 = scmp.eq.s32.totalorder %s28, 1
      %p135 = por %p133, %p134
      %p136 = scmp.ne.s32.totalorder %s127, %s128
      %p137 = scmp.eq.s32.totalorder %s28, 0
      %p138 = por %p136, %p137
      %p139 = scmp.ne.s32.totalorder %s127, %s128
      %p140 = scmp.eq.s32.totalorder %s29, 1
      %p141 = por %p139, %p140
      %p143 = scmp.ne.s32.totalorder %s128, %s142
      %p144 = scmp.eq.s32.totalorder %s29, 0
      %p145 = por %p143, %p144
      %s147 = sadd.s32 %s146, 1
      %p150 = scmp.eq.s32.totalorder %s23, 1
      %p151 = scmp.ne.s32.totalorder %s146, %s148
      %p152 = scmp.eq.s32.totalorder %s23, 0
      %p153 = por %p151, %p152
      %p154 = scmp.ne.s32.totalorder %s146, %s148
      %p155 = scmp.eq.s32.totalorder %s28, 1
      %p156 = por %p154, %p155
      %p157 = scmp.ne.s32.totalorder %s148, %s149
      %p158 = scmp.eq.s32.totalorder %s28, 0
      %p159 = por %p157, %p158
      %p160 = scmp.ne.s32.totalorder %s148, %s149
      %p161 = scmp.eq.s32.totalorder %s29, 1
      %p162 = por %p160, %p161
      %p164 = scmp.ne.s32.totalorder %s149, %s163
      %p165 = scmp.eq.s32.totalorder %s29, 0
      %p166 = por %p164, %p165
      %s168 = sadd.s32 %s167, 1
      %p171 = scmp.eq.s32.totalorder %s23, 1
      %p172 = scmp.ne.s32.totalorder %s167, %s169
      %p173 = scmp.eq.s32.totalorder %s23, 0
      %p174 = por %p172, %p173
      %p175 = scmp.ne.s32.totalorder %s167, %s169
      %p176 = scmp.eq.s32.totalorder %s28, 1
      %p177 = por %p175, %p176
      %p178 = scmp.ne.s32.totalorder %s169, %s170
      %p179 = scmp.eq.s32.totalorder %s28, 0
      %p180 = por %p178, %p179
      %p181 = scmp.ne.s32.totalorder %s169, %s170
      %p182 = scmp.eq.s32.totalorder %s29, 1
      %p183 = por %p181, %p182
      %p185 = scmp.ne.s32.totalorder %s170, %s184
      %p186 = scmp.eq.s32.totalorder %s29, 0
      %p187 = por %p185, %p186
      %s188 = ssub.s32 %s23, %s30
      %p189 = scmp.eq.s32.totalorder %s188, 0
      %s191 = sadd.s32 %s190, 1
      %s192 = scalar_select %p189, %s190, %s191
      %p195 = pneg %p189
      %p196 = scmp.eq.s32.totalorder %s23, 1
      %p197 = por %p195, %p196
      %p198 = scmp.ne.s32.totalorder %s190, %s193
      %p199 = scmp.eq.s32.totalorder %s23, 0
      %p200 = por %p198, %p199
      %p201 = scmp.ne.s32.totalorder %s190, %s193
      %p202 = scmp.eq.s32.totalorder %s28, 1
      %p203 = por %p201, %p202
      %p204 = scmp.ne.s32.totalorder %s193, %s194
      %p205 = scmp.eq.s32.totalorder %s28, 0
      %p206 = por %p204, %p205
      %p207 = scmp.ne.s32.totalorder %s193, %s194
      %p208 = scmp.eq.s32.totalorder %s29, 1
      %p209 = por %p207, %p208
      %p211 = scmp.ne.s32.totalorder %s194, %s210
      %p212 = scmp.eq.s32.totalorder %s29, 0
      %p213 = por %p211, %p212
      %p214 = scmp.le.s32.totalorder 1, %s23
      %p215 = scmp.lt.s32.totalorder %s23, 3
      %p216 = pnand %p214, %p215
      %p217 = pneg %p216
      // Predicated region
      $region9: #{tpu_custom_call.1} parent=5 // pred_check
        _
      $region10: #{tpu_custom_call.1} parent=5 // pred_check_branch
        %219 = sbr.rel (%p216) target = $region12
      $region11: #{tpu_custom_call.1} parent=5 // pred_region
        %s220 = ssub.s32 %s23, 1
        // Predicated region
        $region13: #{tpu_custom_call.1} parent=11 // pred_check
          %p221 = pneg %p96
        $region14: #{tpu_custom_call.1} parent=11 // pred_check_branch
          %223 = sbr.rel (%p221) target = $region16
        $region15: #{tpu_custom_call.1} parent=11 // pred_region
          %225 = vsyncadd [#allocation6], 0
          %s227 = sshll.u32 %s2, 4
          %s228 = int_to_ptr.hbm [resolvable:$true] %s227
          %s229 = sshll.u32 [#allocation7], 4
          %s230 = int_to_ptr.vmem [resolvable:$true] %s229
          %232 = dma.hbm_to_vmem [thread:$0]  %s228, 64, %s230, [#allocation6]
        $region16: #{tpu_custom_call.1} parent=11 // pred_fallthru
          _
        // Predicated region
        $region17: #{tpu_custom_call.1} parent=11 // pred_check
          %p233 = pneg %p117
        $region18: #{tpu_custom_call.1} parent=11 // pred_check_branch
          %235 = sbr.rel (%p233) target = $region20
        $region19: #{tpu_custom_call.1} parent=11 // pred_region
          %237 = vsyncadd [#allocation9], 0
          %s239 = sshll.u32 %s3, 4
          %s240 = int_to_ptr.hbm [resolvable:$true] %s239
          %s241 = sshll.u32 [#allocation8], 4
          %s242 = int_to_ptr.vmem [resolvable:$true] %s241
          %244 = dma.hbm_to_vmem [thread:$0]  %s240, 64, %s242, [#allocation9]
        $region20: #{tpu_custom_call.1} parent=11 // pred_fallthru
          _
        // Predicated region
        $region21: #{tpu_custom_call.1} parent=11 // pred_check
          %p245 = pneg %p138
        $region22: #{tpu_custom_call.1} parent=11 // pred_check_branch
          %247 = sbr.rel (%p245) target = $region24
        $region23: #{tpu_custom_call.1} parent=11 // pred_region
          _
        $region24: #{tpu_custom_call.1} parent=11 // pred_fallthru
          _
        // Predicated region
        $region25: #{tpu_custom_call.1} parent=11 // pred_check
          %p248 = pneg %p159
        $region26: #{tpu_custom_call.1} parent=11 // pred_check_branch
          %250 = sbr.rel (%p248) target = $region28
        $region27: #{tpu_custom_call.1} parent=11 // pred_region
          _
        $region28: #{tpu_custom_call.1} parent=11 // pred_fallthru
          _
        // Predicated region
        $region29: #{tpu_custom_call.1} parent=11 // pred_check
          %p251 = pneg %p180
        $region30: #{tpu_custom_call.1} parent=11 // pred_check_branch
          %253 = sbr.rel (%p251) target = $region32
        $region31: #{tpu_custom_call.1} parent=11 // pred_region
          _
        $region32: #{tpu_custom_call.1} parent=11 // pred_fallthru
          _
      $region12: #{tpu_custom_call.1} parent=5 // pred_fallthru
        _
      %p254 = scmp.lt.s32.totalorder %s23, 2
      // Predicated region
      $region33: #{tpu_custom_call.1} parent=5 // pred_check
        %p255 = pneg %p254
      $region34: #{tpu_custom_call.1} parent=5 // pred_check_branch
        %257 = sbr.rel (%p255) target = $region36
      $region35: #{tpu_custom_call.1} parent=5 // pred_region
        // Predicated region
        $region37: #{tpu_custom_call.1} parent=35 // pred_check
          %p258 = pneg %p43
        $region38: #{tpu_custom_call.1} parent=35 // pred_check_branch
          %260 = sbr.rel (%p258) target = $region40
        $region39: #{tpu_custom_call.1} parent=35 // pred_region
          %s261 = sand.u32 %s33, 1
          %s262 = scalar_lea.sflag [#allocation3], %s261
          %s263 = sand.u32 %s33, 1
          %s264 = smul.addr %s263, 32
          %s265 = scalar_lea.vmem [#allocation2], %s264
          %267 = vsyncadd %s262, 0
          %s268 = smul.addr %s23, 4
          %s269 = smul.addr %s268, 8
          %s270 = scalar_lea.hbm %s0, %s269
          %s271 = sshll.u32 %s270, 4
          %s272 = int_to_ptr.hbm [resolvable:$true] %s271
          %s273 = sshll.u32 %s265, 4
          %s274 = int_to_ptr.vmem [resolvable:$true] %s273
          %279 = dma.hbm_to_vmem [thread:$0]  %s272, 512, %s274, %s262, 256, 256, 16
        $region40: #{tpu_custom_call.1} parent=35 // pred_fallthru
          _
        // Predicated region
        $region41: #{tpu_custom_call.1} parent=35 // pred_check
          %p280 = pneg %p69
        $region42: #{tpu_custom_call.1} parent=35 // pred_check_branch
          %282 = sbr.rel (%p280) target = $region44
        $region43: #{tpu_custom_call.1} parent=35 // pred_region
          %s283 = sand.u32 %s23, 1
          %s284 = scalar_lea.sflag [#allocation6], %s283
          %s285 = sand.u32 %s59, 1
          %s286 = smul.addr %s285, 32
          %s287 = scalar_lea.vmem [#allocation5], %s286
          %289 = vsyncadd %s284, 0
          %s290 = smul.addr %s23, 4
          %s291 = smul.addr %s290, 8
          %s292 = scalar_lea.hbm %s1, %s291
          %s293 = sshll.u32 %s292, 4
          %s294 = int_to_ptr.hbm [resolvable:$true] %s293
          %s295 = sshll.u32 %s287, 4
          %s296 = int_to_ptr.vmem [resolvable:$true] %s295
          %301 = dma.hbm_to_vmem [thread:$0]  %s294, 512, %s296, %s284, 256, 256, 16
        $region44: #{tpu_custom_call.1} parent=35 // pred_fallthru
          _
      $region36: #{tpu_custom_call.1} parent=5 // pred_fallthru
        _
      %p302 = scmp.le.s32.totalorder 1, %s23
      %p303 = scmp.lt.s32.totalorder %s23, 3
      %p304 = pnand %p302, %p303
      %p305 = pneg %p304
      // Predicated region
      $region45: #{tpu_custom_call.1} parent=5 // pred_check
        _
      $region46: #{tpu_custom_call.1} parent=5 // pred_check_branch
        %307 = sbr.rel (%p304) target = $region48
      $region47: #{tpu_custom_call.1} parent=5 // pred_region
        %s308 = ssub.s32 %s23, 1
        %s309 = sand.u32 %s36, 1
        %s310 = scalar_lea.sflag [#allocation3], %s309
        %s311 = sand.u32 %s36, 1
        %s312 = smul.addr %s311, 32
        %s313 = scalar_lea.vmem [#allocation2], %s312
        // Predicated region
        $region49: #{tpu_custom_call.1} parent=47 // pred_check
          %p314 = pneg %p49
        $region50: #{tpu_custom_call.1} parent=47 // pred_check_branch
          %316 = sbr.rel (%p314) target = $region52
        $region51: #{tpu_custom_call.1} parent=47 // pred_region
          %318 = dma.done %s310, 512
        $region52: #{tpu_custom_call.1} parent=47 // pred_fallthru
          _
        %s319 = sand.u32 %s28, 1
        %s320 = scalar_lea.sflag [#allocation6], %s319
        %s321 = sand.u32 %s62, 1
        %s322 = smul.addr %s321, 32
        %s323 = scalar_lea.vmem [#allocation5], %s322
        // Predicated region
        $region53: #{tpu_custom_call.1} parent=47 // pred_check
          %p324 = pneg %p75
        $region54: #{tpu_custom_call.1} parent=47 // pred_check_branch
          %326 = sbr.rel (%p324) target = $region56
        $region55: #{tpu_custom_call.1} parent=47 // pred_region
          %328 = dma.done %s320, 512
        $region56: #{tpu_custom_call.1} parent=47 // pred_fallthru
          _
        // Predicated region
        $region57: #{tpu_custom_call.1} parent=47 // pred_check
          %p329 = pneg %p96
        $region58: #{tpu_custom_call.1} parent=47 // pred_check_branch
          %331 = sbr.rel (%p329) target = $region60
        $region59: #{tpu_custom_call.1} parent=47 // pred_region
          %333 = dma.done [#allocation6], 64
        $region60: #{tpu_custom_call.1} parent=47 // pred_fallthru
          _
        // Predicated region
        $region61: #{tpu_custom_call.1} parent=47 // pred_check
          %p334 = pneg %p117
        $region62: #{tpu_custom_call.1} parent=47 // pred_check_branch
          %336 = sbr.rel (%p334) target = $region64
        $region63: #{tpu_custom_call.1} parent=47 // pred_region
          %338 = dma.done [#allocation9], 64
        $region64: #{tpu_custom_call.1} parent=47 // pred_fallthru
          _
        %s339 = sand.u32 %s36, 1
        %s340 = scalar_lea.sflag [#allocation3], %s339
        %s341 = sand.u32 %s36, 1
        %s342 = smul.addr %s341, 32
        %s343 = scalar_lea.vmem [#allocation2], %s342
        %p344 = pneg %p49
        %p345 = pneg %p46
        %s346 = sand.u32 %s28, 1
        %s347 = scalar_lea.sflag [#allocation6], %s346
        %s348 = sand.u32 %s62, 1
        %s349 = smul.addr %s348, 32
        %s350 = scalar_lea.vmem [#allocation5], %s349
        %p351 = pneg %p75
        %p352 = pneg %p72
        %p353 = pneg %p96
        %p354 = pneg %p93
        %p355 = pneg %p117
        %p356 = pneg %p114
        %p357 = pneg %p138
        %p358 = pneg %p135
        %p359 = pneg %p159
        %p360 = pneg %p156
        %p361 = pneg %p180
        %p362 = pneg %p177
        %p363 = pneg %p206
        %p364 = pneg %p203
        %s365 = sand.u32 %s193, 1
        %s366 = scalar_lea.sflag [#allocation4], %s365
        %s367 = sand.u32 %s193, 1
        %s368 = smul.addr %s367, 32
        %s369 = scalar_lea.vmem [#allocation10], %s368
        %v370 = vld [vmem:[%s313] sm:$0xff]
        %v371 = vld [vmem:[%s313 + $0x8] sm:$0xff]
        %v372 = vld [vmem:[%s313 + $0x10] sm:$0xff]
        %v373 = vld [vmem:[%s313 + $0x18] sm:$0xff]
        %v374 = vld [vmem:[%s323] sm:$0xff]
        %v375 = vld [vmem:[%s323 + $0x8] sm:$0xff]
        %v376 = vld [vmem:[%s323 + $0x10] sm:$0xff]
        %v377 = vld [vmem:[%s323 + $0x18] sm:$0xff]
        %v378 = vadd.f32 %v370, %v374
        %v379 = vadd.f32 %v371, %v375
        %v380 = vadd.f32 %v372, %v376
        %v381 = vadd.f32 %v373, %v377
        %v382 = vadd.f32 %v378, %v379
        %383 = vadd.xlane.f32.xlu0 %v382
        %v384 = vpop.xlane.xlu0 %383
        %v385 = vadd.f32 %v380, %v381
        %386 = vadd.xlane.f32.xlu0 %v385
        %v387 = vpop.xlane.xlu0 %386
        %v388 = vmul.f32 %v384, 0.0078125
        %v389 = vmul.f32 %v387, 0.0078125
        %v390 = vlaneseq
        %v391 = vand.u32 %v390, 127
        %v392 = vadd.s32 %v391, 128
        %v393 = vand.u32 %v391, 15
        %v394 = vand.u32 %v392, 15
        %vm395 = vcmp.lt.s32.totalorder %v393, 8
        %vm396 = vcmp.lt.s32.totalorder %v394, 8
        %vm397 = vcmp.lt.s32.totalorder %v391, 128
        %vm398 = vcmp.lt.s32.totalorder %v392, 128
        %v399 = vsel %vm395, 1, 0
        %v400 = vsel %vm396, 1, 0
        %vm401 = vcmp.eq.s32.totalorder %v399, 1
        %vm402 = vcmp.eq.s32.totalorder %v400, 1
        %v403 = vsel %vm401, %v378, -inf
        %v404 = vsel %vm402, %v379, -inf
        %v405 = vsel %vm401, %v380, -inf
        %v406 = vsel %vm402, %v381, -inf
        %v407 = vmax.f32 %v403, %v404
        %408 = vmax.xlane.f32.xlu0 %v407
        %v409 = vpop.xlane.xlu0 %408
        %v410 = vmax.f32 %v405, %v406
        %411 = vmax.xlane.f32.xlu0 %v410
        %v412 = vpop.xlane.xlu0 %411
        %v413 = vsel %vm401, -inf, %v378
        %v414 = vsel %vm402, -inf, %v379
        %v415 = vsel %vm401, -inf, %v380
        %v416 = vsel %vm402, -inf, %v381
        %v417 = vmax.f32 %v413, %v414
        %418 = vmax.xlane.f32.xlu0 %v417
        %v419 = vpop.xlane.xlu0 %418
        %v420 = vmax.f32 %v415, %v416
        %421 = vmax.xlane.f32.xlu0 %v420
        %v422 = vpop.xlane.xlu0 %421
        %v423 = vsel %vm397, 1, 0
        %v424 = vsel %vm398, 1, 0
        %vm425 = vcmp.eq.s32.totalorder %v423, 1
        %vm426 = vcmp.eq.s32.totalorder %v424, 1
        %v427 = vsel %vm425, %v378, -inf
        %v428 = vsel %vm426, %v379, -inf
        %v429 = vsel %vm425, %v380, -inf
        %v430 = vsel %vm426, %v381, -inf
        %v431 = vmax.f32 %v427, %v428
        %432 = vmax.xlane.f32.xlu0 %v431
        %v433 = vpop.xlane.xlu0 %432
        %v434 = vmax.f32 %v429, %v430
        %435 = vmax.xlane.f32.xlu0 %v434
        %v436 = vpop.xlane.xlu0 %435
        %v437 = vsel %vm425, -inf, %v378
        %v438 = vsel %vm426, -inf, %v379
        %v439 = vsel %vm425, -inf, %v380
        %v440 = vsel %vm426, -inf, %v381
        %v441 = vmax.f32 %v437, %v438
        %442 = vmax.xlane.f32.xlu0 %v441
        %v443 = vpop.xlane.xlu0 %442
        %v444 = vmax.f32 %v439, %v440
        %445 = vmax.xlane.f32.xlu0 %v444
        %v446 = vpop.xlane.xlu0 %445
        %v447 = vadd.f32 %v388, %v409
        %v448 = vadd.f32 %v389, %v412
        %v449 = vadd.f32 %v447, %v419
        %v450 = vadd.f32 %v448, %v422
        %v451 = vadd.f32 %v388, %v433
        %v452 = vadd.f32 %v389, %v436
        %v453 = vadd.f32 %v451, %v443
        %v454 = vadd.f32 %v452, %v446
        %v455 = vld [vmem:[#allocation7] sm:$0xf]
        %v456 = vld [vmem:[#allocation8] sm:$0xf]
        %v458 = vperm.slane %v455, 0
        %v459 = vlaneseq
        %v460 = vshrl.u32 %v459, 7
        %462 = vset.pattern.permute.xlu0 %v460
        %463 = vperm.xlu0 %462, %v458
        %v464 = vpop.permute.xlu0 %463
        %v465 = vlaneseq
        %v466 = vshrl.u32 %v465, 7
        %v467 = vadd.s32 %v466, 8
        %468 = vset.pattern.permute.xlu0 %v467
        %469 = vperm.xlu0 %468, %v458
        %v470 = vpop.permute.xlu0 %469
        %v471 = vperm.slane %v455, 1
        %v472 = vlaneseq
        %v473 = vshrl.u32 %v472, 7
        %475 = vset.pattern.permute.xlu0 %v473
        %476 = vperm.xlu0 %475, %v471
        %v477 = vpop.permute.xlu0 %476
        %v478 = vlaneseq
        %v479 = vshrl.u32 %v478, 7
        %v480 = vadd.s32 %v479, 8
        %481 = vset.pattern.permute.xlu0 %v480
        %482 = vperm.xlu0 %481, %v471
        %v483 = vpop.permute.xlu0 %482
        %v484 = vperm.slane %v455, 2
        %v485 = vlaneseq
        %v486 = vshrl.u32 %v485, 7
        %488 = vset.pattern.permute.xlu0 %v486
        %489 = vperm.xlu0 %488, %v484
        %v490 = vpop.permute.xlu0 %489
        %v491 = vlaneseq
        %v492 = vshrl.u32 %v491, 7
        %v493 = vadd.s32 %v492, 8
        %494 = vset.pattern.permute.xlu0 %v493
        %495 = vperm.xlu0 %494, %v484
        %v496 = vpop.permute.xlu0 %495
        %v497 = vperm.slane %v455, 3
        %v498 = vlaneseq
        %v499 = vshrl.u32 %v498, 7
        %501 = vset.pattern.permute.xlu0 %v499
        %502 = vperm.xlu0 %501, %v497
        %v503 = vpop.permute.xlu0 %502
        %v504 = vlaneseq
        %v505 = vshrl.u32 %v504, 7
        %v506 = vadd.s32 %v505, 8
        %507 = vset.pattern.permute.xlu0 %v506
        %508 = vperm.xlu0 %507, %v497
        %v509 = vpop.permute.xlu0 %508
        %v518 = vmul.f32 %v449, %v464
        %v519 = vmul.f32 %v450, %v470
        %v520 = vmul.f32 %v449, %v477
        %v521 = vmul.f32 %v450, %v483
        %v522 = vmul.f32 %v449, %v490
        %v523 = vmul.f32 %v450, %v496
        %v524 = vmul.f32 %v449, %v503
        %v525 = vmul.f32 %v450, %v509
        %534 = vset.pattern.permute.xlu0 0
        %535 = vperm.xlu0 %534, %v518
        %v536 = vpop.permute.xlu0 %535
        %537 = vset.pattern.permute.xlu0 0
        %538 = vperm.xlu0 %537, %v519
        %v539 = vpop.permute.xlu0 %538
        %540 = vset.pattern.permute.xlu0 0
        %541 = vperm.xlu0 %540, %v520
        %v542 = vpop.permute.xlu0 %541
        %543 = vset.pattern.permute.xlu0 0
        %544 = vperm.xlu0 %543, %v521
        %v545 = vpop.permute.xlu0 %544
        %546 = vset.pattern.permute.xlu0 0
        %547 = vperm.xlu0 %546, %v522
        %v548 = vpop.permute.xlu0 %547
        %549 = vset.pattern.permute.xlu0 0
        %550 = vperm.xlu0 %549, %v523
        %v551 = vpop.permute.xlu0 %550
        %552 = vset.pattern.permute.xlu0 0
        %553 = vperm.xlu0 %552, %v524
        %v554 = vpop.permute.xlu0 %553
        %555 = vset.pattern.permute.xlu0 0
        %556 = vperm.xlu0 %555, %v525
        %v557 = vpop.permute.xlu0 %556
        %v558 = vperm.slane %v536, %v391
        %v559 = vadd.s32 %v391, 4294967288
        %v560 = vperm.slane %v539, %v559
        %vm561 = vcmask 130112
        %v562 = vsel %vm561, %v560, %v558
        %v563 = vperm.slane %v542, %v391
        %v564 = vperm.slane %v545, %v559
        %v565 = vsel %vm561, %v564, %v563
        %v566 = vperm.slane %v548, %v391
        %v567 = vperm.slane %v551, %v559
        %v568 = vsel %vm561, %v567, %v566
        %v569 = vperm.slane %v554, %v391
        %v570 = vperm.slane %v557, %v559
        %v571 = vsel %vm561, %v570, %v569
        %vm572 = vcmask 1041409
        %v573 = vsel %vm572, %v565, %v562
        %vm574 = vcmask 1042434
        %v575 = vsel %vm574, %v568, %v573
        %vm576 = vcmask 1043459
        %v577 = vsel %vm576, %v571, %v575
        %vm579 = vcmask 125952
        %v580 = vsel %vm579, %v577, 0.0
        %581 = vadd.xlane.f32.xlu0 %v580
        %v582 = vpop.xlane.xlu0 %581
        %v584 = vperm.slane %v456, 0
        %v585 = vlaneseq
        %v586 = vshrl.u32 %v585, 7
        %588 = vset.pattern.permute.xlu0 %v586
        %589 = vperm.xlu0 %588, %v584
        %v590 = vpop.permute.xlu0 %589
        %v591 = vlaneseq
        %v592 = vshrl.u32 %v591, 7
        %v593 = vadd.s32 %v592, 8
        %594 = vset.pattern.permute.xlu0 %v593
        %595 = vperm.xlu0 %594, %v584
        %v596 = vpop.permute.xlu0 %595
        %v597 = vperm.slane %v456, 1
        %v598 = vlaneseq
        %v599 = vshrl.u32 %v598, 7
        %601 = vset.pattern.permute.xlu0 %v599
        %602 = vperm.xlu0 %601, %v597
        %v603 = vpop.permute.xlu0 %602
        %v604 = vlaneseq
        %v605 = vshrl.u32 %v604, 7
        %v606 = vadd.s32 %v605, 8
        %607 = vset.pattern.permute.xlu0 %v606
        %608 = vperm.xlu0 %607, %v597
        %v609 = vpop.permute.xlu0 %608
        %v610 = vperm.slane %v456, 2
        %v611 = vlaneseq
        %v612 = vshrl.u32 %v611, 7
        %614 = vset.pattern.permute.xlu0 %v612
        %615 = vperm.xlu0 %614, %v610
        %v616 = vpop.permute.xlu0 %615
        %v617 = vlaneseq
        %v618 = vshrl.u32 %v617, 7
        %v619 = vadd.s32 %v618, 8
        %620 = vset.pattern.permute.xlu0 %v619
        %621 = vperm.xlu0 %620, %v610
        %v622 = vpop.permute.xlu0 %621
        %v623 = vperm.slane %v456, 3
        %v624 = vlaneseq
        %v625 = vshrl.u32 %v624, 7
        %627 = vset.pattern.permute.xlu0 %v625
        %628 = vperm.xlu0 %627, %v623
        %v629 = vpop.permute.xlu0 %628
        %v630 = vlaneseq
        %v631 = vshrl.u32 %v630, 7
        %v632 = vadd.s32 %v631, 8
        %633 = vset.pattern.permute.xlu0 %v632
        %634 = vperm.xlu0 %633, %v623
        %v635 = vpop.permute.xlu0 %634
        %v644 = vmul.f32 %v453, %v590
        %v645 = vmul.f32 %v454, %v596
        %v646 = vmul.f32 %v453, %v603
        %v647 = vmul.f32 %v454, %v609
        %v648 = vmul.f32 %v453, %v616
        %v649 = vmul.f32 %v454, %v622
        %v650 = vmul.f32 %v453, %v629
        %v651 = vmul.f32 %v454, %v635
        %660 = vset.pattern.permute.xlu0 0
        %661 = vperm.xlu0 %660, %v644
        %v662 = vpop.permute.xlu0 %661
        %663 = vset.pattern.permute.xlu0 0
        %664 = vperm.xlu0 %663, %v645
        %v665 = vpop.permute.xlu0 %664
        %666 = vset.pattern.permute.xlu0 0
        %667 = vperm.xlu0 %666, %v646
        %v668 = vpop.permute.xlu0 %667
        %669 = vset.pattern.permute.xlu0 0
        %670 = vperm.xlu0 %669, %v647
        %v671 = vpop.permute.xlu0 %670
        %672 = vset.pattern.permute.xlu0 0
        %673 = vperm.xlu0 %672, %v648
        %v674 = vpop.permute.xlu0 %673
        %675 = vset.pattern.permute.xlu0 0
        %676 = vperm.xlu0 %675, %v649
        %v677 = vpop.permute.xlu0 %676
        %678 = vset.pattern.permute.xlu0 0
        %679 = vperm.xlu0 %678, %v650
        %v680 = vpop.permute.xlu0 %679
        %681 = vset.pattern.permute.xlu0 0
        %682 = vperm.xlu0 %681, %v651
        %v683 = vpop.permute.xlu0 %682
        %v684 = vperm.slane %v662, %v391
        %v685 = vperm.slane %v665, %v559
        %v686 = vsel %vm561, %v685, %v684
        %v687 = vperm.slane %v668, %v391
        %v688 = vperm.slane %v671, %v559
        %v689 = vsel %vm561, %v688, %v687
        %v690 = vperm.slane %v674, %v391
        %v691 = vperm.slane %v677, %v559
        %v692 = vsel %vm561, %v691, %v690
        %v693 = vperm.slane %v680, %v391
        %v694 = vperm.slane %v683, %v559
        %v695 = vsel %vm561, %v694, %v693
        %v696 = vsel %vm572, %v689, %v686
        %v697 = vsel %vm574, %v692, %v696
        %v698 = vsel %vm576, %v695, %v697
        %v700 = vsel %vm579, %v698, 0.0
        %701 = vadd.xlane.f32.xlu0 %v700
        %v702 = vpop.xlane.xlu0 %701
        %v703 = vadd.f32 %v582, %v702
        %v704 = vld [vmem:[%s4] sm:$0x1]
        %v706 = vperm.slane %v704, 0
        %v707 = vlaneseq
        %v708 = vshrl.u32 %v707, 7
        %710 = vset.pattern.permute.xlu0 %v708
        %711 = vperm.xlu0 %710, %v706
        %v712 = vpop.permute.xlu0 %711
        %v714 = vadd.f32 %v703, %v712
        %v715 = vmax.f32 %v714, 0.0
        %v716 = vld [vmem:[%s5] sm:$0x3]
        %v718 = vperm.slane %v716, 0
        %v719 = vlaneseq
        %v720 = vshrl.u32 %v719, 7
        %722 = vset.pattern.permute.xlu0 %v720
        %723 = vperm.xlu0 %722, %v718
        %v724 = vpop.permute.xlu0 %723
        %v725 = vperm.slane %v716, 1
        %v726 = vlaneseq
        %v727 = vshrl.u32 %v726, 7
        %729 = vset.pattern.permute.xlu0 %v727
        %730 = vperm.xlu0 %729, %v725
        %v731 = vpop.permute.xlu0 %730
        %v734 = vmul.f32 %v715, %v724
        %v735 = vmul.f32 %v715, %v731
        %738 = vset.pattern.permute.xlu0 0
        %739 = vperm.xlu0 %738, %v734
        %v740 = vpop.permute.xlu0 %739
        %741 = vset.pattern.permute.xlu0 0
        %742 = vperm.xlu0 %741, %v735
        %v743 = vpop.permute.xlu0 %742
        %v744 = vperm.slane %v740, %v391
        %v745 = vperm.slane %v743, %v391
        %v746 = vsel %vm572, %v745, %v744
        %vm748 = vcmask 25600
        %v749 = vsel %vm748, %v746, 0.0
        %750 = vadd.xlane.f32.xlu0 %v749
        %v751 = vpop.xlane.xlu0 %750
        %v752 = vld [vmem:[%s6] sm:$0x1]
        %v754 = vperm.slane %v752, 0
        %v755 = vlaneseq
        %v756 = vshrl.u32 %v755, 7
        %758 = vset.pattern.permute.xlu0 %v756
        %759 = vperm.xlu0 %758, %v754
        %v760 = vpop.permute.xlu0 %759
        %v762 = vadd.f32 %v751, %v760
        %v763 = vxor.u32 %v762, 2147483648
        %v764 = vmul.f32 %v763, 1.442695
        %v765 = vpow.pop %v764
        %v766 = vadd.f32 %v765, 1.0
        %v767 = vrcp.pop %v766
        %v768 = vmul.f32 %v766, %v767
        %v769 = vsub.f32 1.0, %v768
        %v770 = vmul.f32 %v767, %v769
        %v771 = vadd.f32 %v767, %v770
        %vm772 = vweird.f32 %v766
        %vm773 = vweird.f32 %v767
        %vm774 = vmor %vm772, %vm773
        %v775 = vsel %vm774, %v767, %v771
        %v776 = vand.u32 2147483647, %v766
        %vm777 = vcmp.eq.f32.partialorder %v776, 8.507059e+37
        %v778 = vand.u32 %v766, 2147483648
        %v779 = vor.u32 1.1754944e-38, %v778
        %v780 = vsel %vm777, %v779, %v775
        %v781 = vmul.f32 1.0, %v780
        %v782 = vmul.f32 %v781, 0.5
        %v784 = vrot.slane %v782, 1
        %v786 = vadd.f32 %v782, %v784
        %s788 = vtos %v786
        %v789 = vstv %s788
        %v791 = vmul.f32 %v378, %v789
        %v792 = vmul.f32 %v379, %v789
        %v793 = vmul.f32 %v380, %v789
        %v794 = vmul.f32 %v381, %v789
        %795 = vst [vmem:[%s369] sm:$0xff] %v791
        %796 = vst [vmem:[%s369 + $0x8] sm:$0xff] %v792
        %797 = vst [vmem:[%s369 + $0x10] sm:$0xff] %v793
        %798 = vst [vmem:[%s369 + $0x18] sm:$0xff] %v794
        %s799 = sand.u32 %s193, 1
        %s800 = scalar_lea.sflag [#allocation4], %s799
        %s801 = sand.u32 %s193, 1
        %s802 = smul.addr %s801, 32
        %s803 = scalar_lea.vmem [#allocation10], %s802
        // Predicated region
        $region65: #{tpu_custom_call.1} parent=47 // pred_check
          %p804 = pneg %p203
        $region66: #{tpu_custom_call.1} parent=47 // pred_check_branch
          %806 = sbr.rel (%p804) target = $region68
        $region67: #{tpu_custom_call.1} parent=47 // pred_region
          %808 = vsyncadd %s800, 0
          %s809 = smul.addr %s28, 4
          %s810 = smul.addr %s809, 8
          %s811 = scalar_lea.hbm %s7, %s810
          %s812 = sshll.u32 %s803, 4
          %s813 = int_to_ptr.vmem [resolvable:$true] %s812
          %s814 = sshll.u32 %s811, 4
          %s815 = int_to_ptr.hbm [resolvable:$true] %s814
          %820 = dma.vmem_to_hbm [thread:$0]  %s813, 512, %s815, %s800, 256, 256, 16
        $region68: #{tpu_custom_call.1} parent=47 // pred_fallthru
          _
      $region48: #{tpu_custom_call.1} parent=5 // pred_fallthru
        _
      %p821 = scmp.le.s32.totalorder 2, %s23
      // Predicated region
      $region69: #{tpu_custom_call.1} parent=5 // pred_check
        %p822 = pneg %p821
      $region70: #{tpu_custom_call.1} parent=5 // pred_check_branch
        %824 = sbr.rel (%p822) target = $region72
      $region71: #{tpu_custom_call.1} parent=5 // pred_region
        %s825 = ssub.s32 %s23, 2
        // Predicated region
        $region73: #{tpu_custom_call.1} parent=71 // pred_check
          %p826 = pneg %p209
        $region74: #{tpu_custom_call.1} parent=71 // pred_check_branch
          %828 = sbr.rel (%p826) target = $region76
        $region75: #{tpu_custom_call.1} parent=71 // pred_region
          %s829 = sand.u32 %s194, 1
          %s830 = scalar_lea.sflag [#allocation4], %s829
          %s831 = sand.u32 %s194, 1
          %s832 = smul.addr %s831, 32
          %s833 = scalar_lea.vmem [#allocation10], %s832
          %835 = dma.done %s830, 512
        $region76: #{tpu_custom_call.1} parent=71 // pred_fallthru
          _
      $region72: #{tpu_custom_call.1} parent=5 // pred_fallthru
        _
    $region6: #{tpu_custom_call.1} parent=1 // loop_footer
      %s27 = sadd.s32 1, %s23
    $region7: #{tpu_custom_call.1} parent=1 // loop_footer_branch
      %22 = sbr.rel target = $region3
    $region8: #{tpu_custom_call.1} parent=1 // loop_exit
      _
    %836 = vsyncpa [#allocation3], 1
    %s837 = scalar_lea.sflag [#allocation3], 1
    %838 = vsyncpa %s837, 1
    %839 = vsyncpa [#allocation6], 1
    %s840 = scalar_lea.sflag [#allocation6], 1
    %841 = vsyncpa %s840, 1
    %842 = vsyncpa [#allocation9], 1
    %843 = vsyncpa [#allocation4], 1
    %s844 = scalar_lea.sflag [#allocation4], 1
    %845 = vsyncpa %s844, 1

</llo_original>
